<compile_context>
chip_gen: v6e
topology: v6e:2x2x1
jax: 0.10.0
libtpu: 0.0.40
codegen_flags: <defaults>
</compile_context>

<pallas_src>
import jax
import jax.numpy as jnp
import numpy as np
from jax.experimental import pallas as pl
from jax.experimental.pallas import tpu as pltpu
import functools

_F32_EPS = 1.1920929e-07  # torch.finfo(torch.float32).eps (plain Python float literal)


def _loc_loss_kernel(loc_ref, center_ref, tgt_ref, out_ref, *, clip_length):
    clip = float(clip_length)
    maxn = 2.0 * float(clip_length)

    center = center_ref[...]              # [1, 1, K]   prior centers, lane-dense
    t_start = tgt_ref[:, :, 0:1]           # [B, N, 1]   lane slices inside one tile
    t_end = tgt_ref[:, :, 1:2]              # [B, N, 1]
    t_lab = tgt_ref[:, :, 2:3]               # [B, N, 1]

    # ---- match ground truth to every prior (K in lanes, N in sublanes) ----
    left = (center - t_start) * clip          # [B, N, K]
    right = (t_end - center) * clip           # [B, N, K]
    area = left + right
    area = jnp.where(left < 0.0, maxn, area)
    area = jnp.where(right < 0.0, maxn, area)

    B, N, K = area.shape
    best_area = jnp.min(area, axis=1, keepdims=True)                  # [B, 1, K]

    # first index achieving the minimum (matches torch.min(dim=1) tie-breaking)
    row = jax.lax.broadcasted_iota(jnp.int32, (B, N, K), 1)           # [B, N, K]
    masked_row = jnp.where(area == best_area, row, N)
    first_idx = jnp.min(masked_row, axis=1, keepdims=True)            # [B, 1, K]
    one_hot = (row == first_idx).astype(jnp.float32)                  # [B, N, K]

    # gather of the best truth: lt0 = left@best, lab = label@best
    lt0 = jnp.sum(one_hot * left, axis=1, keepdims=True)              # [B, 1, K]
    lab = jnp.sum(one_hot * t_lab, axis=1, keepdims=True)             # [B, 1, K]
    # best_area = left + right at the best index whenever best_area < maxn, so the
    # gathered right offset is just best_area - lt0 (non-pos priors masked below).
    lt1 = best_area - lt0                                              # [B, 1, K]

    pos = jnp.logical_and(best_area < maxn, lab > 0.0)                 # [B, 1, K]
    pos_f = pos.astype(jnp.float32)

    # ---- masked linear-IoU loss on positive priors ----
    p0 = jnp.maximum(loc_ref[:, 0:1, :], 0.0)                          # loc_p.clamp(min=0)
    p1 = jnp.maximum(loc_ref[:, 1:2, :], 0.0)

    inter = jnp.minimum(p0, lt0) + jnp.minimum(p1, lt1)
    union = (p0 + p1) + (lt0 + lt1) - inter
    ious = inter * pl.reciprocal(jnp.maximum(union, _F32_EPS), approx=True)
    loss_k = jnp.where(pos, 1.0 - ious, 0.0)                           # 'liou'

    # ---- fused epilogue: one cross-lane reduction pass for (sum_loss, num_pos) ----
    stacked = jnp.concatenate([loss_k, pos_f], axis=1)                 # [B, 2, K]
    partial = jnp.sum(stacked, axis=0)                                 # [2, K]  (VPU adds)
    out_ref[...] = jnp.sum(partial, axis=-1, keepdims=True)            # [2, 1]  (one XLU fold)


def loc_loss_pallas(loc_data, priors, targets, *, clip_length):
    """Pallas TPU implementation of LocLoss.forward (returns scalar loss_l)."""
    B, K, _ = loc_data.shape

    # Lane-dense relayout done once in the wrapper (pure layout plumbing).
    loc_t = jnp.transpose(loc_data.astype(jnp.float32), (0, 2, 1))        # [B, 2, K]
    center = priors.astype(jnp.float32)[:, 0].reshape(1, 1, K)            # [1, 1, K]
    tgt = targets.astype(jnp.float32)                                     # [B, N, 3]

    kernel = functools.partial(_loc_loss_kernel, clip_length=float(clip_length))

    vmem_spec = pl.BlockSpec(memory_space=pltpu.MemorySpace.VMEM)
    sums = pl.pallas_call(
        kernel,
        out_shape=jax.ShapeDtypeStruct((2, 1), jnp.float32),
        in_specs=[vmem_spec, vmem_spec, vmem_spec],
        out_specs=pl.BlockSpec(memory_space=pltpu.MemorySpace.VMEM),
    )(loc_t, center, tgt)

    total = sums[0, 0]
    npos = sums[1, 0]
    # iou_loss(..., reduction='mean') -> total/npos ; then loss /= max(npos, 1)
    return jnp.where(npos > 0.0, total / (npos * npos), jnp.float32(0.0))


def loc_loss_ref(loc_data, priors, targets, clip_length):
    """Pure-JAX reference mirroring the PyTorch semantics."""
    B, K, _ = loc_data.shape
    maxn = 2.0 * clip_length
    sum_loss = jnp.float32(0.0)
    npos_tot = jnp.float32(0.0)
    for b in range(B):
        truths = targets[b, :, :2]
        labels = targets[b, :, 2]
        center = priors[:, 0]
        left = (center[:, None] - truths[None, :, 0]) * clip_length
        right = (truths[None, :, 1] - center[:, None]) * clip_length
        area = left + right
        area = jnp.where(left < 0, maxn, area)
        area = jnp.where(right < 0, maxn, area)
        best_area = area.min(axis=1)
        best_idx = jnp.argmin(area, axis=1)
        tr = truths[best_idx]
        conf = jnp.where(best_area >= maxn, 0.0, labels[best_idx])
        pos = conf > 0
        lt0 = (center - tr[:, 0]) * clip_length
        lt1 = (tr[:, 1] - center) * clip_length
        p = jnp.maximum(loc_data[b], 0.0)
        inter = jnp.minimum(p[:, 0], lt0) + jnp.minimum(p[:, 1], lt1)
        union = (p[:, 0] + p[:, 1]) + (lt0 + lt1) - inter
        ious = inter / jnp.maximum(union, 1.1920929e-07)
        loss = jnp.where(pos, 1.0 - ious, 0.0)
        sum_loss = sum_loss + loss.sum()
        npos_tot = npos_tot + pos.sum().astype(jnp.float32)
    return jnp.where(npos_tot > 0, sum_loss / (npos_tot * npos_tot), jnp.float32(0.0))


if __name__ == "__main__":
    B, K, N = 2, 128, 8
    num_classes = 5
    clip_length = 32

    key = jax.random.PRNGKey(0)
    k1, k2, k3, k4 = jax.random.split(key, 4)

    # priors: evenly spaced centers in [0, 1]; second column (width) unused by forward.
    centers = (jnp.arange(K, dtype=jnp.float32) + 0.5) / K
    priors = jnp.stack([centers, jnp.full((K,), 1.0 / K, dtype=jnp.float32)], axis=1)

    # targets: [B, N, 3] = (start, end, label>=1)
    starts = jax.random.uniform(k1, (B, N), minval=0.0, maxval=0.6)
    lengths = jax.random.uniform(k2, (B, N), minval=0.05, maxval=0.35)
    ends = jnp.clip(starts + lengths, 0.0, 1.0)
    labels = jax.random.randint(k3, (B, N), 1, num_classes).astype(jnp.float32)
    targets = jnp.stack([starts, ends, labels], axis=-1)

    # loc_data: predicted (left, right) offsets
    loc_data = jax.random.normal(k4, (B, K, 2), dtype=jnp.float32) * 4.0 + 4.0

    loss = loc_loss_pallas(loc_data, priors, targets, clip_length=clip_length)
    loss = jax.block_until_ready(loss)

    ref = loc_loss_ref(loc_data, priors, targets, clip_length)
    ref = jax.block_until_ready(ref)

    assert np.isfinite(np.asarray(loss)), "kernel produced non-finite loss"
    # approx=True reciprocal (EUP) + lt1 = best_area - lt0 are not bit-exact vs the
    # reference; ~1e-4 relative error is irrelevant for a training loss.
    np.testing.assert_allclose(np.asarray(loss), np.asarray(ref), rtol=5e-3, atol=1e-5)
    print("KERNEL_OK")
</pallas_src>

<mosaic_0001>
module attributes {stable_mosaic.version = 11 : i64} {
  func.func @_loc_loss_kernel(%arg0: memref<2x2x128xf32, #tpu.memory_space<vmem>>, %arg1: memref<1x1x128xf32, #tpu.memory_space<vmem>>, %arg2: memref<2x8x3xf32, #tpu.memory_space<vmem>>, %arg3: memref<2x1xf32, #tpu.memory_space<vmem>>) attributes {dimension_semantics = [], scalar_prefetch = 0 : i64, scratch_operands = 0 : i64, tpu.core_type = #tpu.core_type<tc>} {
    %c0 = arith.constant 0 : index
    %c0_0 = arith.constant 0 : index
    %c0_1 = arith.constant 0 : index
    %0 = vector.load %arg1[%c0, %c0_0, %c0_1] : memref<1x1x128xf32, #tpu.memory_space<vmem>>, vector<1x1x128xf32>
    %c0_2 = arith.constant 0 : index
    %c0_3 = arith.constant 0 : index
    %c0_4 = arith.constant 0 : index
    %1 = vector.load %arg2[%c0_2, %c0_3, %c0_4] : memref<2x8x3xf32, #tpu.memory_space<vmem>>, vector<2x8x1xf32>
    %c0_5 = arith.constant 0 : index
    %c0_6 = arith.constant 0 : index
    %c1 = arith.constant 1 : index
    %2 = vector.load %arg2[%c0_5, %c0_6, %c1] : memref<2x8x3xf32, #tpu.memory_space<vmem>>, vector<2x8x1xf32>
    %c0_7 = arith.constant 0 : index
    %c0_8 = arith.constant 0 : index
    %c2 = arith.constant 2 : index
    %3 = vector.load %arg2[%c0_7, %c0_8, %c2] : memref<2x8x3xf32, #tpu.memory_space<vmem>>, vector<2x8x1xf32>
    %4 = vector.broadcast %0 : vector<1x1x128xf32> to vector<2x8x128xf32>
    %5 = vector.broadcast %1 : vector<2x8x1xf32> to vector<2x8x128xf32>
    %6 = arith.subf %4, %5 : vector<2x8x128xf32>
    %cst = arith.constant 3.200000e+01 : f32
    %7 = vector.broadcast %cst : f32 to vector<2x8x128xf32>
    %8 = arith.mulf %6, %7 : vector<2x8x128xf32>
    %9 = vector.broadcast %2 : vector<2x8x1xf32> to vector<2x8x128xf32>
    %10 = vector.broadcast %0 : vector<1x1x128xf32> to vector<2x8x128xf32>
    %11 = arith.subf %9, %10 : vector<2x8x128xf32>
    %cst_9 = arith.constant 3.200000e+01 : f32
    %12 = vector.broadcast %cst_9 : f32 to vector<2x8x128xf32>
    %13 = arith.mulf %11, %12 : vector<2x8x128xf32>
    %14 = arith.addf %8, %13 : vector<2x8x128xf32>
    %cst_10 = arith.constant 0.000000e+00 : f32
    %15 = vector.broadcast %cst_10 : f32 to vector<2x8x128xf32>
    %16 = arith.cmpf olt, %8, %15 : vector<2x8x128xf32>
    %cst_11 = arith.constant 6.400000e+01 : f32
    %17 = vector.broadcast %cst_11 : f32 to vector<2x8x128xf32>
    %18 = arith.select %16, %17, %14 : vector<2x8x128xi1>, vector<2x8x128xf32>
    %cst_12 = arith.constant 0.000000e+00 : f32
    %19 = vector.broadcast %cst_12 : f32 to vector<2x8x128xf32>
    %20 = arith.cmpf olt, %13, %19 : vector<2x8x128xf32>
    %cst_13 = arith.constant 6.400000e+01 : f32
    %21 = vector.broadcast %cst_13 : f32 to vector<2x8x128xf32>
    %22 = arith.select %20, %21, %18 : vector<2x8x128xi1>, vector<2x8x128xf32>
    %cst_14 = arith.constant dense<0x7F800000> : vector<2x128xf32>
    %23 = vector.multi_reduction <minimumf>, %22, %cst_14 [1] : vector<2x8x128xf32> to vector<2x128xf32>
    %24 = vector.shape_cast %23 : vector<2x128xf32> to vector<2x1x128xf32>
    %25 = tpu.iota {dimensions = array<i32: 1>} : vector<2x8x128xi32>
    %26 = vector.broadcast %24 : vector<2x1x128xf32> to vector<2x8x128xf32>
    %27 = arith.cmpf oeq, %22, %26 : vector<2x8x128xf32>
    %c8_i32 = arith.constant 8 : i32
    %28 = vector.broadcast %c8_i32 : i32 to vector<2x8x128xi32>
    %29 = arith.select %27, %25, %28 : vector<2x8x128xi1>, vector<2x8x128xi32>
    %cst_15 = arith.constant dense<2147483647> : vector<2x128xi32>
    %30 = vector.multi_reduction <minsi>, %29, %cst_15 [1] : vector<2x8x128xi32> to vector<2x128xi32>
    %31 = vector.shape_cast %30 : vector<2x128xi32> to vector<2x1x128xi32>
    %32 = vector.broadcast %31 : vector<2x1x128xi32> to vector<2x8x128xi32>
    %33 = arith.cmpi eq, %25, %32 : vector<2x8x128xi32>
    %34 = arith.extui %33 : vector<2x8x128xi1> to vector<2x8x128xi32>
    %35 = arith.sitofp %34 : vector<2x8x128xi32> to vector<2x8x128xf32>
    %36 = arith.mulf %35, %8 : vector<2x8x128xf32>
    %cst_16 = arith.constant dense<0.000000e+00> : vector<2x128xf32>
    %37 = vector.multi_reduction <add>, %36, %cst_16 [1] : vector<2x8x128xf32> to vector<2x128xf32>
    %38 = vector.shape_cast %37 : vector<2x128xf32> to vector<2x1x128xf32>
    %39 = vector.broadcast %3 : vector<2x8x1xf32> to vector<2x8x128xf32>
    %40 = arith.mulf %35, %39 : vector<2x8x128xf32>
    %cst_17 = arith.constant dense<0.000000e+00> : vector<2x128xf32>
    %41 = vector.multi_reduction <add>, %40, %cst_17 [1] : vector<2x8x128xf32> to vector<2x128xf32>
    %42 = vector.shape_cast %41 : vector<2x128xf32> to vector<2x1x128xf32>
    %43 = arith.subf %24, %38 : vector<2x1x128xf32>
    %cst_18 = arith.constant 6.400000e+01 : f32
    %44 = vector.broadcast %cst_18 : f32 to vector<2x1x128xf32>
    %45 = arith.cmpf olt, %24, %44 : vector<2x1x128xf32>
    %cst_19 = arith.constant 0.000000e+00 : f32
    %46 = vector.broadcast %cst_19 : f32 to vector<2x1x128xf32>
    %47 = arith.cmpf ogt, %42, %46 : vector<2x1x128xf32>
    %48 = arith.andi %45, %47 : vector<2x1x128xi1>
    %49 = arith.extui %48 : vector<2x1x128xi1> to vector<2x1x128xi32>
    %50 = arith.sitofp %49 : vector<2x1x128xi32> to vector<2x1x128xf32>
    %c0_20 = arith.constant 0 : index
    %c0_21 = arith.constant 0 : index
    %c0_22 = arith.constant 0 : index
    %51 = vector.load %arg0[%c0_20, %c0_21, %c0_22] : memref<2x2x128xf32, #tpu.memory_space<vmem>>, vector<2x1x128xf32>
    %cst_23 = arith.constant 0.000000e+00 : f32
    %52 = vector.broadcast %cst_23 : f32 to vector<2x1x128xf32>
    %53 = arith.maximumf %51, %52 : vector<2x1x128xf32>
    %c0_24 = arith.constant 0 : index
    %c1_25 = arith.constant 1 : index
    %c0_26 = arith.constant 0 : index
    %54 = vector.load %arg0[%c0_24, %c1_25, %c0_26] : memref<2x2x128xf32, #tpu.memory_space<vmem>>, vector<2x1x128xf32>
    %cst_27 = arith.constant 0.000000e+00 : f32
    %55 = vector.broadcast %cst_27 : f32 to vector<2x1x128xf32>
    %56 = arith.maximumf %54, %55 : vector<2x1x128xf32>
    %57 = arith.minimumf %53, %38 : vector<2x1x128xf32>
    %58 = arith.minimumf %56, %43 : vector<2x1x128xf32>
    %59 = arith.addf %57, %58 : vector<2x1x128xf32>
    %60 = arith.addf %53, %56 : vector<2x1x128xf32>
    %61 = arith.addf %38, %43 : vector<2x1x128xf32>
    %62 = arith.addf %60, %61 : vector<2x1x128xf32>
    %63 = arith.subf %62, %59 : vector<2x1x128xf32>
    %cst_28 = arith.constant 1.1920929E-7 : f32
    %64 = vector.broadcast %cst_28 : f32 to vector<2x1x128xf32>
    %65 = arith.maximumf %63, %64 : vector<2x1x128xf32>
    %66 = tpu.reciprocal %65 {approx = true} : vector<2x1x128xf32> -> vector<2x1x128xf32>
    %67 = arith.mulf %59, %66 : vector<2x1x128xf32>
    %cst_29 = arith.constant 1.000000e+00 : f32
    %68 = vector.broadcast %cst_29 : f32 to vector<2x1x128xf32>
    %69 = arith.subf %68, %67 : vector<2x1x128xf32>
    %cst_30 = arith.constant 0.000000e+00 : f32
    %70 = vector.broadcast %cst_30 : f32 to vector<2x1x128xf32>
    %71 = arith.select %48, %69, %70 : vector<2x1x128xi1>, vector<2x1x128xf32>
    %72 = tpu.concatenate %71, %50 in 1 : vector<2x1x128xf32>, vector<2x1x128xf32> -> vector<2x2x128xf32>
    %cst_31 = arith.constant dense<0.000000e+00> : vector<2x128xf32>
    %73 = vector.multi_reduction <add>, %72, %cst_31 [0] : vector<2x2x128xf32> to vector<2x128xf32>
    %cst_32 = arith.constant dense<0.000000e+00> : vector<2xf32>
    %74 = vector.multi_reduction <add>, %73, %cst_32 [1] : vector<2x128xf32> to vector<2xf32>
    %75 = vector.shape_cast %74 : vector<2xf32> to vector<2x1xf32>
    %c0_33 = arith.constant 0 : index
    %c0_34 = arith.constant 0 : index
    %76 = vector.load %arg3[%c0_33, %c0_34] : memref<2x1xf32, #tpu.memory_space<vmem>>, vector<2x1xf32>
    tpu.vector_store %arg3[%c0_33, %c0_34], %75 {strides = array<i32>} : memref<2x1xf32, #tpu.memory_space<vmem>>, vector<2x1xf32>,
    return
  }
}

</mosaic_0001>

<llo_original>
// kernel: tpu_custom_call.1
$region0: #{tpu_custom_call.1}
  #allocation0 [shape = 'u32[]', space=smem, size = 0x4, offset = 0x4, fixed_abs, tag = 'smem constant byte address 0x4 - core index']
  #allocation1 [shape = 'u32[144,128]{1,0:T(1,128)}', space=vmem, size = 0x12000, scoped, tag = 'internal scratch']
  %s0 = inlined_call_operand.vmem [shape: f32[2,2,128], index: 0, kind: input, shape index: {}]
  %s1 = inlined_call_operand.vmem [shape: f32[1,1,128], index: 1, kind: input, shape index: {}]
  %s2 = inlined_call_operand.vmem [shape: f32[2,8,3], index: 2, kind: input, shape index: {}]
  %s3 = inlined_call_operand.vmem [shape: f32[2,1], index: 3, kind: output, shape index: {}]
  %s4 = sld [smem:[#allocation0]]
  $region22: #{tpu_custom_call.1} parent=0
    _
  %s6 = ssub.s32 1, %s4
  %s7 = scalar_select 0, %s6, %s4
  // Predicated region
  $region2: #{tpu_custom_call.1} parent=0 // pred_check
    _
  $region3: #{tpu_custom_call.1} parent=0 // pred_check_branch
    %9 = sbr.rel (0) target = $region5
  $region4: #{tpu_custom_call.1} parent=0 // pred_region
    _
  $region5: #{tpu_custom_call.1} parent=0 // pred_fallthru
    _
  // Predicated region
  $region6: #{tpu_custom_call.1} parent=0 // pred_check
    _
  $region7: #{tpu_custom_call.1} parent=0 // pred_check_branch
    %11 = sbr.rel (0) target = $region9
  $region8: #{tpu_custom_call.1} parent=0 // pred_region
    _
  $region9: #{tpu_custom_call.1} parent=0 // pred_fallthru
    _
  // Predicated region
  $region10: #{tpu_custom_call.1} parent=0 // pred_check
    _
  $region11: #{tpu_custom_call.1} parent=0 // pred_check_branch
    %13 = sbr.rel (0) target = $region13
  $region12: #{tpu_custom_call.1} parent=0 // pred_region
    _
  $region13: #{tpu_custom_call.1} parent=0 // pred_fallthru
    _
  %v14 = vld [vmem:[%s1] sm:$0x1]
  %v15 = vld [vmem:[%s2] sm:$0xff]
  %v16 = vld [vmem:[%s2 + $0x8] sm:$0xff]
  %v18 = vlaneseq
  %v19 = vshrl.u32 %v18, 7
  %v20 = vsub.s32 0, %v19
  %v21 = vrot.slane %v14, %v20
  %24 = vset.pattern.permute.xlu0 0
  %25 = vperm.xlu0 %24, %v15
  %v26 = vpop.permute.xlu0 %25
  %29 = vset.pattern.permute.xlu0 0
  %30 = vperm.xlu0 %29, %v16
  %v31 = vpop.permute.xlu0 %30
  %v33 = vsub.f32 %v21, %v26
  %v34 = vsub.f32 %v21, %v31
  %v35 = vmul.f32 %v33, 32.0
  %v36 = vmul.f32 %v34, 32.0
  %37 = vset.pattern.permute.xlu0 1
  %38 = vperm.xlu0 %37, %v15
  %v39 = vpop.permute.xlu0 %38
  %41 = vset.pattern.permute.xlu0 1
  %42 = vperm.xlu0 %41, %v16
  %v43 = vpop.permute.xlu0 %42
  %v45 = vsub.f32 %v39, %v21
  %v46 = vsub.f32 %v43, %v21
  %v47 = vmul.f32 %v45, 32.0
  %v48 = vmul.f32 %v46, 32.0
  %v49 = vadd.f32 %v35, %v47
  %v50 = vadd.f32 %v36, %v48
  %vm51 = vcmp.lt.f32.partialorder %v35, 0.0
  %vm52 = vcmp.lt.f32.partialorder %v36, 0.0
  %v53 = vsel %vm51, 64.0, %v49
  %v54 = vsel %vm52, 64.0, %v50
  %vm55 = vcmp.lt.f32.partialorder %v47, 0.0
  %vm56 = vcmp.lt.f32.partialorder %v48, 0.0
  %v57 = vsel %vm55, 64.0, %v53
  %v58 = vsel %vm56, 64.0, %v54
  %v59 = vrot.slane %v57, 4
  %v60 = vmin.f32 %v57, %v59
  %v61 = vrot.slane %v60, 2
  %v62 = vmin.f32 %v60, %v61
  %v63 = vrot.slane %v62, 1
  %v64 = vmin.f32 %v62, %v63
  %v65 = vrot.slane %v58, 4
  %v66 = vmin.f32 %v58, %v65
  %v67 = vrot.slane %v66, 2
  %v68 = vmin.f32 %v66, %v67
  %v69 = vrot.slane %v68, 1
  %v70 = vmin.f32 %v68, %v69
  %v71 = vlaneseq
  %v72 = vshrl.u32 %v71, 7
  %vm73 = vcmp.eq.f32.partialorder %v57, %v64
  %vm74 = vcmp.eq.f32.partialorder %v58, %v70
  %v75 = vsel %vm73, %v72, 8
  %v76 = vsel %vm74, %v72, 8
  %v77 = vrot.slane %v75, 4
  %vm78 = vcmp.lt.s32.totalorder %v75, %v77
  %v79 = vsel %vm78, %v75, %v77
  %v80 = vrot.slane %v79, 2
  %vm81 = vcmp.lt.s32.totalorder %v79, %v80
  %v82 = vsel %vm81, %v79, %v80
  %v83 = vrot.slane %v82, 1
  %vm84 = vcmp.lt.s32.totalorder %v82, %v83
  %v85 = vsel %vm84, %v82, %v83
  %v86 = vrot.slane %v76, 4
  %vm87 = vcmp.lt.s32.totalorder %v76, %v86
  %v88 = vsel %vm87, %v76, %v86
  %v89 = vrot.slane %v88, 2
  %vm90 = vcmp.lt.s32.totalorder %v88, %v89
  %v91 = vsel %vm90, %v88, %v89
  %v92 = vrot.slane %v91, 1
  %vm93 = vcmp.lt.s32.totalorder %v91, %v92
  %v94 = vsel %vm93, %v91, %v92
  %vm95 = vcmp.eq.s32.totalorder %v72, %v85
  %vm96 = vcmp.eq.s32.totalorder %v72, %v94
  %v97 = vsel %vm95, 1, 0
  %v98 = vsel %vm96, 1, 0
  %v99 = vcvt.s32.f32 %v97
  %v100 = vcvt.s32.f32 %v98
  %v101 = vmul.f32 %v99, %v35
  %v102 = vmul.f32 %v100, %v36
  %v103 = vrot.slane %v101, 4
  %v104 = vadd.f32 %v101, %v103
  %v105 = vrot.slane %v104, 2
  %v106 = vadd.f32 %v104, %v105
  %v107 = vrot.slane %v106, 1
  %v108 = vadd.f32 %v106, %v107
  %v109 = vrot.slane %v102, 4
  %v110 = vadd.f32 %v102, %v109
  %v111 = vrot.slane %v110, 2
  %v112 = vadd.f32 %v110, %v111
  %v113 = vrot.slane %v112, 1
  %v114 = vadd.f32 %v112, %v113
  %115 = vset.pattern.permute.xlu0 2
  %116 = vperm.xlu0 %115, %v15
  %v117 = vpop.permute.xlu0 %116
  %119 = vset.pattern.permute.xlu0 2
  %120 = vperm.xlu0 %119, %v16
  %v121 = vpop.permute.xlu0 %120
  %v123 = vmul.f32 %v99, %v117
  %v124 = vmul.f32 %v100, %v121
  %v125 = vrot.slane %v123, 4
  %v126 = vadd.f32 %v123, %v125
  %v127 = vrot.slane %v126, 2
  %v128 = vadd.f32 %v126, %v127
  %v129 = vrot.slane %v128, 1
  %v130 = vadd.f32 %v128, %v129
  %v131 = vrot.slane %v124, 4
  %v132 = vadd.f32 %v124, %v131
  %v133 = vrot.slane %v132, 2
  %v134 = vadd.f32 %v132, %v133
  %v135 = vrot.slane %v134, 1
  %v136 = vadd.f32 %v134, %v135
  %v137 = vsub.f32 %v64, %v108
  %v138 = vsub.f32 %v70, %v114
  %vm139 = vcmp.lt.f32.partialorder %v64, 64.0
  %vm140 = vcmp.lt.f32.partialorder %v70, 64.0
  %vm141 = vcmp.gt.f32.partialorder %v130, 0.0
  %vm142 = vcmp.gt.f32.partialorder %v136, 0.0
  %vm143 = vmand %vm139, %vm141
  %vm144 = vmand %vm140, %vm142
  %v145 = vsel %vm143, 1, 0
  %v146 = vsel %vm144, 1, 0
  %v147 = vcvt.s32.f32 %v145
  %v148 = vcvt.s32.f32 %v146
  %v149 = vld [vmem:[%s0] sm:$0x1]
  %v150 = vld [vmem:[%s0 + $0x2] sm:$0x1]
  %v151 = vmax.f32 %v149, 0.0
  %v152 = vmax.f32 %v150, 0.0
  %v153 = vld [vmem:[%s0 + $0x1] sm:$0x1]
  %v154 = vld [vmem:[%s0 + $0x3] sm:$0x1]
  %v155 = vmax.f32 %v153, 0.0
  %v156 = vmax.f32 %v154, 0.0
  %v157 = vmin.f32 %v151, %v108
  %v158 = vmin.f32 %v152, %v114
  %v159 = vmin.f32 %v155, %v137
  %v160 = vmin.f32 %v156, %v138
  %v161 = vadd.f32 %v157, %v159
  %v162 = vadd.f32 %v158, %v160
  %v163 = vadd.f32 %v151, %v155
  %v164 = vadd.f32 %v152, %v156
  %v165 = vadd.f32 %v108, %v137
  %v166 = vadd.f32 %v114, %v138
  %v167 = vadd.f32 %v163, %v165
  %v168 = vadd.f32 %v164, %v166
  %v169 = vsub.f32 %v167, %v161
  %v170 = vsub.f32 %v168, %v162
  %v171 = vmax.f32 %v169, 1.1920929e-07
  %v172 = vmax.f32 %v170, 1.1920929e-07
  %v173 = vrcp.pop %v171
  %v174 = vrcp.pop %v172
  %v175 = vmul.f32 %v161, %v173
  %v176 = vmul.f32 %v162, %v174
  %v177 = vsub.f32 1.0, %v175
  %v178 = vsub.f32 1.0, %v176
  %v179 = vsel %vm143, %v177, 0.0
  %v180 = vsel %vm144, %v178, 0.0
  %vm181 = vcmask 1040384
  %v182 = vsel %vm181, %v179, %v147
  %v183 = vsel %vm181, %v180, %v148
  %vm184 = vcmask 1041408
  %v185 = vsel %vm184, %v182, 0.0
  %v186 = vsel %vm184, %v183, 0.0
  %v187 = vadd.f32 %v185, %v186
  %v188 = vsel %vm184, %v187, 0.0
  %189 = vadd.xlane.f32.xlu0 %v188
  %v190 = vpop.xlane.xlu0 %189
  %vm191 = vcmask 1024
  %192 = vst.msk [vmem:[%s3] sm:$0x3] %vm191, %v190
  // Predicated region
  $region14: #{tpu_custom_call.1} parent=0 // pred_check
    _
  $region15: #{tpu_custom_call.1} parent=0 // pred_check_branch
    %194 = sbr.rel (0) target = $region17
  $region16: #{tpu_custom_call.1} parent=0 // pred_region
    _
  $region17: #{tpu_custom_call.1} parent=0 // pred_fallthru
    _
  // Predicated region
  $region18: #{tpu_custom_call.1} parent=0 // pred_check
    _
  $region19: #{tpu_custom_call.1} parent=0 // pred_check_branch
    %196 = sbr.rel (0) target = $region21
  $region20: #{tpu_custom_call.1} parent=0 // pred_region
    _
  $region21: #{tpu_custom_call.1} parent=0 // pred_fallthru
    _

</llo_original>
